<compile_context>
chip_gen: v7x
topology: tpu7x:2x2x1
jax: 0.10.0
libtpu: 0.0.40
codegen_flags: <defaults>
</compile_context>

<pallas_src>
import functools

import jax
import jax.numpy as jnp
from jax.experimental import pallas as pl
from jax.experimental.pallas import tpu as pltpu


def _addcoords_kernel(x_ref, o_ref, *, C, H, W, k, tR):
    # x_ref: (1, C, tR, L), o_ref: (1, C+3, tR, L), with L = k*W grouped image rows.
    L = k * W

    # Pass-through copy of the original feature channels.
    o_ref[:, :C, :, :] = x_ref[...]

    # Grouped-row index (global) and lane index for this tile.
    g0 = pl.program_id(1) * tR
    g = jax.lax.broadcasted_iota(jnp.int32, (tR, L), 0) + g0
    l = jax.lax.broadcasted_iota(jnp.int32, (tR, L), 1)

    g_f = g.astype(jnp.float32)
    l_f = l.astype(jnp.float32)
    if k == 1:
        row_f = g_f
        col_f = l_f
    else:
        # l < L <= 2^16  ->  the f32 divide and its floor are exact.
        l_div = jnp.floor(l_f / jnp.float32(W))      # image row within the group
        row_f = g_f * jnp.float32(k) + l_div
        col_f = l_f - l_div * jnp.float32(W)

    # Folded multiply-add constants (no vector divide).  max(., 1) guards the
    # degenerate H==1 / W==1 case (PyTorch would emit inf/NaN there).
    sx = 2.0 / max(H - 1, 1)
    sy = 2.0 / max(W - 1, 1)
    xx_c = row_f * jnp.float32(sx) - 1.0
    yy_c = col_f * jnp.float32(sy) - 1.0
    rr = jnp.sqrt((xx_c - 0.5) * (xx_c - 0.5) + (yy_c - 0.5) * (yy_c - 0.5))

    # Direct per-channel slab stores: dense (tR, L) tiles, no sublane-axis concat.
    o_ref[0, C, :, :] = xx_c.astype(o_ref.dtype)
    o_ref[0, C + 1, :, :] = yy_c.astype(o_ref.dtype)
    o_ref[0, C + 2, :, :] = rr.astype(o_ref.dtype)


def _find_row_group(H, W):
    """Smallest k dividing H with (k*W) % 128 == 0 (lane-dense), k*W kept small."""
    for cand in range(1, H + 1):
        if H % cand == 0 and (W * cand) % 128 == 0 and W * cand <= (1 << 16):
            return cand
    return 1   # fallback: correct, just lane-masked stores for odd shapes


def _choose_row_tile(R, B, bytes_per_grouped_row, budget, align):
    """Largest row tile under the VMEM budget, with >= ~4 grid steps for megacore."""
    tR = max(1, budget // bytes_per_grouped_row)
    tR = min(tR, R)
    # v7x has 2 TensorCores: keep at least ~4 grid steps while tiles stay >= align rows.
    while B * ((R + tR - 1) // tR) < 4 and tR > align:
        tR = max(align, tR // 2)
    if tR >= R:
        return R                       # full axis in one block (always legal)
    tR = max(align, (tR // align) * align)
    return min(tR, R)


def add_coords(x):
    """x: (B, C, H, W) -> (B, C+3, H, W), same dtype. CoordConv AddCoords(with_r=True)."""
    B, C, H, W = x.shape
    itemsize = jnp.dtype(x.dtype).itemsize

    # Lane-dense grouping of image rows: L = k*W multiple of 128 when possible.
    k = _find_row_group(H, W)
    L = k * W
    R = H // k
    x_g = x.reshape(B, C, R, L)        # free reshape on contiguous NCHW

    # Sublane alignment (packed dtypes want more rows per tile: bf16 -> 16, int8 -> 32).
    align = 8 * max(1, 4 // itemsize)

    # VMEM sizing derived from the chip (v5e/v6e: 128 MiB, v7x: 64 MiB).
    try:
        vmem_cap = pltpu.get_tpu_info().vmem_capacity_bytes
    except Exception:                   # conservative fallback if query unavailable
        vmem_cap = 64 * 1024 * 1024
    budget = min(vmem_cap // 3, 32 * 1024 * 1024)       # 2x(in+out) block bytes
    bytes_per_grouped_row = 2 * (2 * C + 3) * L * itemsize
    tR = _choose_row_tile(R, B, bytes_per_grouped_row, budget, align)
    block_bytes = tR * bytes_per_grouped_row
    vmem_limit = int(min(vmem_cap, block_bytes + 16 * 1024 * 1024))

    kernel = functools.partial(_addcoords_kernel, C=C, H=H, W=W, k=k, tR=tR)

    out_g = pl.pallas_call(
        kernel,
        out_shape=jax.ShapeDtypeStruct((B, C + 3, R, L), x.dtype),
        grid=(B, pl.cdiv(R, tR)),
        in_specs=[pl.BlockSpec((1, C, tR, L), lambda b, r: (b, 0, r, 0))],
        out_specs=pl.BlockSpec((1, C + 3, tR, L), lambda b, r: (b, 0, r, 0)),
        compiler_params=pltpu.CompilerParams(
            dimension_semantics=("parallel", "parallel"),
            vmem_limit_bytes=vmem_limit,
        ),
        cost_estimate=pl.CostEstimate(
            flops=10 * B * H * W,                          # coordinate MADs / squares
            transcendentals=B * H * W,                     # sqrt
            bytes_accessed=(2 * C + 3) * B * H * W * itemsize,
        ),
    )(x_g)

    return out_g.reshape(B, C + 3, H, W)


def add_coords_ref(x):
    """Pure-JAX reference matching the PyTorch module semantics (non-degenerate H, W)."""
    B, C, H, W = x.shape
    dt = x.dtype
    ii, jj = jnp.meshgrid(jnp.arange(H, dtype=dt), jnp.arange(W, dtype=dt),
                          indexing="ij")
    xx_c = ii / (H - 1) * 2 - 1
    yy_c = jj / (W - 1) * 2 - 1
    xx_b = jnp.broadcast_to(xx_c[None, None], (B, 1, H, W))
    yy_b = jnp.broadcast_to(yy_c[None, None], (B, 1, H, W))
    rr = jnp.sqrt((xx_b - 0.5) ** 2 + (yy_b - 0.5) ** 2)
    return jnp.concatenate([x, xx_b, yy_b, rr], axis=1)


if __name__ == "__main__":
    key = jax.random.PRNGKey(0)
    B, C, H, W = 2, 4, 16, 16
    x = jax.random.normal(key, (B, C, H, W), dtype=jnp.float32)

    out = jax.block_until_ready(add_coords(x))
    ref = add_coords_ref(x)

    assert out.shape == (B, C + 3, H, W), out.shape
    assert out.dtype == x.dtype, out.dtype
    assert jnp.allclose(out, ref, atol=1e-5, rtol=1e-5), "mismatch vs reference"

    print("KERNEL_OK")
</pallas_src>

<mosaic_0001>
module attributes {stable_mosaic.version = 11 : i64} {
  func.func @_addcoords_kernel(%arg0: i32, %arg1: i32, %arg2: memref<1x4x2x128xf32, #tpu.memory_space<vmem>>, %arg3: memref<1x7x2x128xf32, #tpu.memory_space<vmem>>) attributes {dimension_semantics = [#tpu.dimension_semantics<parallel>, #tpu.dimension_semantics<parallel>], iteration_bounds = array<i64: 2, 1>, scalar_prefetch = 0 : i64, scratch_operands = 0 : i64, tpu.core_type = #tpu.core_type<tc>, window_params = [{transform_indices = @transform_0, window_bounds = array<i64: 1, 4, 2, 128>}, {transform_indices = @transform_1, window_bounds = array<i64: 1, 7, 2, 128>}]} {
    %c0 = arith.constant 0 : index
    %c0_0 = arith.constant 0 : index
    %c0_1 = arith.constant 0 : index
    %c0_2 = arith.constant 0 : index
    %0 = vector.load %arg2[%c0, %c0_0, %c0_1, %c0_2] : memref<1x4x2x128xf32, #tpu.memory_space<vmem>>, vector<1x4x2x128xf32>
    %c0_3 = arith.constant 0 : index
    %c0_4 = arith.constant 0 : index
    %c0_5 = arith.constant 0 : index
    %c0_6 = arith.constant 0 : index
    %1 = vector.load %arg3[%c0_3, %c0_4, %c0_5, %c0_6] : memref<1x7x2x128xf32, #tpu.memory_space<vmem>>, vector<1x4x2x128xf32>
    tpu.vector_store %arg3[%c0_3, %c0_4, %c0_5, %c0_6], %0 {strides = array<i32>} : memref<1x7x2x128xf32, #tpu.memory_space<vmem>>, vector<1x4x2x128xf32>,
    %c2_i32 = arith.constant 2 : i32
    %2 = arith.muli %arg1, %c2_i32 : i32
    %3 = tpu.iota {dimensions = array<i32: 0>} : vector<2x128xi32>
    %4 = vector.broadcast %2 : i32 to vector<2x128xi32>
    %5 = arith.addi %3, %4 : vector<2x128xi32>
    %6 = tpu.iota {dimensions = array<i32: 1>} : vector<2x128xi32>
    %7 = arith.sitofp %5 : vector<2x128xi32> to vector<2x128xf32>
    %8 = arith.sitofp %6 : vector<2x128xi32> to vector<2x128xf32>
    %cst = arith.constant 1.600000e+01 : f32
    %9 = vector.broadcast %cst : f32 to vector<2x128xf32>
    %10 = arith.divf %8, %9 : vector<2x128xf32>
    %11 = math.floor %10 : vector<2x128xf32>
    %cst_7 = arith.constant 8.000000e+00 : f32
    %12 = vector.broadcast %cst_7 : f32 to vector<2x128xf32>
    %13 = arith.mulf %7, %12 : vector<2x128xf32>
    %14 = arith.addf %13, %11 : vector<2x128xf32>
    %cst_8 = arith.constant 1.600000e+01 : f32
    %15 = vector.broadcast %cst_8 : f32 to vector<2x128xf32>
    %16 = arith.mulf %11, %15 : vector<2x128xf32>
    %17 = arith.subf %8, %16 : vector<2x128xf32>
    %cst_9 = arith.constant 0.13333334 : f32
    %18 = vector.broadcast %cst_9 : f32 to vector<2x128xf32>
    %19 = arith.mulf %14, %18 : vector<2x128xf32>
    %cst_10 = arith.constant 1.000000e+00 : f32
    %20 = vector.broadcast %cst_10 : f32 to vector<2x128xf32>
    %21 = arith.subf %19, %20 : vector<2x128xf32>
    %cst_11 = arith.constant 0.13333334 : f32
    %22 = vector.broadcast %cst_11 : f32 to vector<2x128xf32>
    %23 = arith.mulf %17, %22 : vector<2x128xf32>
    %cst_12 = arith.constant 1.000000e+00 : f32
    %24 = vector.broadcast %cst_12 : f32 to vector<2x128xf32>
    %25 = arith.subf %23, %24 : vector<2x128xf32>
    %cst_13 = arith.constant 5.000000e-01 : f32
    %26 = vector.broadcast %cst_13 : f32 to vector<2x128xf32>
    %27 = arith.subf %21, %26 : vector<2x128xf32>
    %cst_14 = arith.constant 5.000000e-01 : f32
    %28 = vector.broadcast %cst_14 : f32 to vector<2x128xf32>
    %29 = arith.subf %21, %28 : vector<2x128xf32>
    %30 = arith.mulf %27, %29 : vector<2x128xf32>
    %cst_15 = arith.constant 5.000000e-01 : f32
    %31 = vector.broadcast %cst_15 : f32 to vector<2x128xf32>
    %32 = arith.subf %25, %31 : vector<2x128xf32>
    %cst_16 = arith.constant 5.000000e-01 : f32
    %33 = vector.broadcast %cst_16 : f32 to vector<2x128xf32>
    %34 = arith.subf %25, %33 : vector<2x128xf32>
    %35 = arith.mulf %32, %34 : vector<2x128xf32>
    %36 = arith.addf %30, %35 : vector<2x128xf32>
    %37 = math.sqrt %36 : vector<2x128xf32>
    %c0_17 = arith.constant 0 : index
    %c4 = arith.constant 4 : index
    %c0_18 = arith.constant 0 : index
    %c0_19 = arith.constant 0 : index
    %38 = vector.load %arg3[%c0_17, %c4, %c0_18, %c0_19] : memref<1x7x2x128xf32, #tpu.memory_space<vmem>>, vector<1x1x2x128xf32>
    %39 = vector.shape_cast %38 : vector<1x1x2x128xf32> to vector<2x128xf32>
    %40 = vector.shape_cast %21 : vector<2x128xf32> to vector<1x1x2x128xf32>
    tpu.vector_store %arg3[%c0_17, %c4, %c0_18, %c0_19], %40 {strides = array<i32>} : memref<1x7x2x128xf32, #tpu.memory_space<vmem>>, vector<1x1x2x128xf32>,
    %c0_20 = arith.constant 0 : index
    %c5 = arith.constant 5 : index
    %c0_21 = arith.constant 0 : index
    %c0_22 = arith.constant 0 : index
    %41 = vector.load %arg3[%c0_20, %c5, %c0_21, %c0_22] : memref<1x7x2x128xf32, #tpu.memory_space<vmem>>, vector<1x1x2x128xf32>
    %42 = vector.shape_cast %41 : vector<1x1x2x128xf32> to vector<2x128xf32>
    %43 = vector.shape_cast %25 : vector<2x128xf32> to vector<1x1x2x128xf32>
    tpu.vector_store %arg3[%c0_20, %c5, %c0_21, %c0_22], %43 {strides = array<i32>} : memref<1x7x2x128xf32, #tpu.memory_space<vmem>>, vector<1x1x2x128xf32>,
    %c0_23 = arith.constant 0 : index
    %c6 = arith.constant 6 : index
    %c0_24 = arith.constant 0 : index
    %c0_25 = arith.constant 0 : index
    %44 = vector.load %arg3[%c0_23, %c6, %c0_24, %c0_25] : memref<1x7x2x128xf32, #tpu.memory_space<vmem>>, vector<1x1x2x128xf32>
    %45 = vector.shape_cast %44 : vector<1x1x2x128xf32> to vector<2x128xf32>
    %46 = vector.shape_cast %37 : vector<2x128xf32> to vector<1x1x2x128xf32>
    tpu.vector_store %arg3[%c0_23, %c6, %c0_24, %c0_25], %46 {strides = array<i32>} : memref<1x7x2x128xf32, #tpu.memory_space<vmem>>, vector<1x1x2x128xf32>,
    return
  }
  func.func @transform_0(%arg0: i32, %arg1: i32) -> (i32, i32, i32, i32) {
    %c0_i32 = arith.constant 0 : i32
    %c0_i32_0 = arith.constant 0 : i32
    %c0_i32_1 = arith.constant 0 : i32
    return %arg0, %c0_i32, %arg1, %c0_i32_0 : i32, i32, i32, i32
  }
  func.func @transform_1(%arg0: i32, %arg1: i32) -> (i32, i32, i32, i32) {
    %c0_i32 = arith.constant 0 : i32
    %c0_i32_0 = arith.constant 0 : i32
    %c0_i32_1 = arith.constant 0 : i32
    return %arg0, %c0_i32, %arg1, %c0_i32_0 : i32, i32, i32, i32
  }
}

</mosaic_0001>

<llo_original>
// kernel: tpu_custom_call.1
$region0: #{tpu_custom_call.1}
  #allocation0 [shape = 'u32[]', space=smem, size = 0x4, offset = 0x4, fixed_abs, tag = 'smem constant byte address 0x4 - core index']
  #allocation1 [shape = 'u32[144,128]{1,0:T(1,128)}', space=vmem, size = 0x12000, scoped, tag = 'internal scratch']
  %s0 = inlined_call_operand.hbm [shape: f32[2,4,2,128], index: 0, kind: input, shape index: {}]
  %s1 = inlined_call_operand.hbm [shape: f32[2,7,2,128], index: 1, kind: output, shape index: {}]
  %s2 = sld [smem:[#allocation0]]
  $region41: #{tpu_custom_call.1} parent=0
    _
  %s4 = ssub.s32 1, %s2
  %s5 = scalar_select 0, %s4, %s2
  $region1: #{tpu_custom_call.1} parent=0
    #allocation2 [shape = 'u8[8192]{0}', space=vmem, size = 0x2000, scoped, tag = 'input window, operand 0']
    #allocation3 [shape = 's32[2]{0}', space=sflag, size = 0x8, scoped, tag = 'scoped memory for tpu_custom_call.1']
    #allocation4 [shape = 's32[2]{0}', space=sflag, size = 0x8, scoped, tag = 'scoped memory for tpu_custom_call.1']
    #allocation5 [shape = 'u8[14336]{0}', space=vmem, size = 0x3800, scoped, tag = 'output window, operand 0']
    %6 = vsyncpa [#allocation3], 0
    %s7 = scalar_lea.sflag [#allocation3], 1
    %8 = vsyncpa %s7, 0
    %9 = vsyncpa [#allocation4], 0
    %s10 = scalar_lea.sflag [#allocation4], 1
    %11 = vsyncpa %s10, 0
    loop: start=0, step=1, limit=4
    $region2: #{tpu_custom_call.1} parent=1 // loop_pre_header
      _
    $region3: #{tpu_custom_call.1} parent=1 // loop_header
      %s13 = sphi 0, %s17
      %p14 = scmp.ge.s32.totalorder %s13, 4
      %s20 = sphi 0, %s32
      %s21 = sphi 0, %s28
      %s22 = sphi 0, %s20
      %s23 = sphi 0, %s21
      %s24 = sphi 0, %s22
      %s25 = sphi 0, %s23
      %s37 = sphi 0, %s39
      %s40 = sphi 0, %s37
      %s41 = sphi 0, %s40
      %s57 = sphi 0, %s41
      %s65 = sphi 0, %s67
      %s68 = sphi 0, %s65
      %s69 = sphi 0, %s68
      %s85 = sphi 0, %s69
    $region4: #{tpu_custom_call.1} parent=1 // loop_header_branch
      %16 = sbr.rel (%p14) target = $region8
    $region5: #{tpu_custom_call.1} parent=1 // loop_body
      %s18 = ssub.s32 %s13, 1
      %s19 = ssub.s32 %s13, 2
      %s26 = sadd.s32 1, %s21
      %p27 = scmp.ge.s32.totalorder %s26, 1
      %s28 = scalar_select %p27, 0, %s26
      %s29 = sadd.s32 1, %s20
      %s30 = scalar_select %p27, %s29, %s20
      %p31 = scmp.ge.s32.totalorder %s30, 2
      %s32 = scalar_select %p31, 0, %s30
      %s33 = ssub.s32 %s20, %s32
      %s34 = ssub.s32 %s21, %s28
      %s35 = sor.u32 %s33, %s34
      %p36 = scmp.eq.s32.totalorder %s35, 0
      %s38 = sadd.s32 %s37, 1
      %s39 = scalar_select %p36, %s37, %s38
      %p42 = pneg %p36
      %p43 = scmp.eq.s32.totalorder %s13, 1
      %p44 = por %p42, %p43
      %p45 = scmp.ne.s32.totalorder %s37, %s40
      %p46 = scmp.eq.s32.totalorder %s13, 0
      %p47 = por %p45, %p46
      %p48 = scmp.ne.s32.totalorder %s37, %s40
      %p49 = scmp.eq.s32.totalorder %s18, 1
      %p50 = por %p48, %p49
      %p51 = scmp.ne.s32.totalorder %s40, %s41
      %p52 = scmp.eq.s32.totalorder %s18, 0
      %p53 = por %p51, %p52
      %p54 = scmp.ne.s32.totalorder %s40, %s41
      %p55 = scmp.eq.s32.totalorder %s19, 1
      %p56 = por %p54, %p55
      %p58 = scmp.ne.s32.totalorder %s41, %s57
      %p59 = scmp.eq.s32.totalorder %s19, 0
      %p60 = por %p58, %p59
      %s61 = ssub.s32 %s20, %s32
      %s62 = ssub.s32 %s21, %s28
      %s63 = sor.u32 %s61, %s62
      %p64 = scmp.eq.s32.totalorder %s63, 0
      %s66 = sadd.s32 %s65, 1
      %s67 = scalar_select %p64, %s65, %s66
      %p70 = pneg %p64
      %p71 = scmp.eq.s32.totalorder %s13, 1
      %p72 = por %p70, %p71
      %p73 = scmp.ne.s32.totalorder %s65, %s68
      %p74 = scmp.eq.s32.totalorder %s13, 0
      %p75 = por %p73, %p74
      %p76 = scmp.ne.s32.totalorder %s65, %s68
      %p77 = scmp.eq.s32.totalorder %s18, 1
      %p78 = por %p76, %p77
      %p79 = scmp.ne.s32.totalorder %s68, %s69
      %p80 = scmp.eq.s32.totalorder %s18, 0
      %p81 = por %p79, %p80
      %p82 = scmp.ne.s32.totalorder %s68, %s69
      %p83 = scmp.eq.s32.totalorder %s19, 1
      %p84 = por %p82, %p83
      %p86 = scmp.ne.s32.totalorder %s69, %s85
      %p87 = scmp.eq.s32.totalorder %s19, 0
      %p88 = por %p86, %p87
      %p89 = scmp.le.s32.totalorder 1, %s13
      %p90 = scmp.lt.s32.totalorder %s13, 3
      %p91 = pnand %p89, %p90
      %p92 = pneg %p91
      // Predicated region
      $region9: #{tpu_custom_call.1} parent=5 // pred_check
        _
      $region10: #{tpu_custom_call.1} parent=5 // pred_check_branch
        %94 = sbr.rel (%p91) target = $region12
      $region11: #{tpu_custom_call.1} parent=5 // pred_region
        %s95 = ssub.s32 %s13, 1
      $region12: #{tpu_custom_call.1} parent=5 // pred_fallthru
        _
      %p96 = scmp.lt.s32.totalorder %s13, 2
      // Predicated region
      $region13: #{tpu_custom_call.1} parent=5 // pred_check
        %p97 = pneg %p96
      $region14: #{tpu_custom_call.1} parent=5 // pred_check_branch
        %99 = sbr.rel (%p97) target = $region16
      $region15: #{tpu_custom_call.1} parent=5 // pred_region
        // Predicated region
        $region17: #{tpu_custom_call.1} parent=15 // pred_check
          %p100 = pneg %p47
        $region18: #{tpu_custom_call.1} parent=15 // pred_check_branch
          %102 = sbr.rel (%p100) target = $region20
        $region19: #{tpu_custom_call.1} parent=15 // pred_region
          %s103 = sand.u32 %s37, 1
          %s104 = scalar_lea.sflag [#allocation3], %s103
          %s105 = sand.u32 %s37, 1
          %s106 = smul.addr %s105, 8
          %s107 = scalar_lea.vmem [#allocation2], %s106
          %s109 = ssub.s32 128, 128
          %110 = vsyncadd %s104, %s109
          %s111 = smul.addr %s20, 4
          %s112 = sadd.s32 %s21, %s111
          %s113 = smul.addr %s112, 32
          %s114 = scalar_lea.hbm %s0, %s113
          %s115 = sshll.u32 %s107, 4
          %s116 = int_to_ptr.vmem [resolvable:$true] %s115
          %121 = dma.hbm_to_vmem [thread:$0]  %s114, 128, %s116, %s104, 32, 32, 2
        $region20: #{tpu_custom_call.1} parent=15 // pred_fallthru
          _
      $region16: #{tpu_custom_call.1} parent=5 // pred_fallthru
        _
      %p122 = scmp.le.s32.totalorder 1, %s13
      %p123 = scmp.lt.s32.totalorder %s13, 3
      %p124 = pnand %p122, %p123
      %p125 = pneg %p124
      // Predicated region
      $region21: #{tpu_custom_call.1} parent=5 // pred_check
        _
      $region22: #{tpu_custom_call.1} parent=5 // pred_check_branch
        %127 = sbr.rel (%p124) target = $region24
      $region23: #{tpu_custom_call.1} parent=5 // pred_region
        %s128 = ssub.s32 %s13, 1
        %s129 = sand.u32 %s40, 1
        %s130 = scalar_lea.sflag [#allocation3], %s129
        %s131 = sand.u32 %s40, 1
        %s132 = smul.addr %s131, 8
        %s133 = scalar_lea.vmem [#allocation2], %s132
        // Predicated region
        $region25: #{tpu_custom_call.1} parent=23 // pred_check
          %p134 = pneg %p53
        $region26: #{tpu_custom_call.1} parent=23 // pred_check_branch
          %136 = sbr.rel (%p134) target = $region28
        $region27: #{tpu_custom_call.1} parent=23 // pred_region
          %137 = dma.done %s130, 128
        $region28: #{tpu_custom_call.1} parent=23 // pred_fallthru
          _
        %s138 = sand.u32 %s40, 1
        %s139 = scalar_lea.sflag [#allocation3], %s138
        %s140 = sand.u32 %s40, 1
        %s141 = smul.addr %s140, 8
        %s142 = scalar_lea.vmem [#allocation2], %s141
        %p143 = pneg %p53
        %p144 = pneg %p50
        %p145 = pneg %p81
        %p146 = pneg %p78
        %s147 = sand.u32 %s68, 1
        %s148 = scalar_lea.sflag [#allocation4], %s147
        %s149 = sand.u32 %s68, 1
        %s150 = smul.addr %s149, 14
        %s151 = scalar_lea.vmem [#allocation5], %s150
        %v152 = vld [vmem:[%s133] sm:$0x3]
        %v153 = vld [vmem:[%s133 + $0x2] sm:$0x3]
        %v154 = vld [vmem:[%s133 + $0x4] sm:$0x3]
        %v155 = vld [vmem:[%s133 + $0x6] sm:$0x3]
        %156 = vst [vmem:[%s151] sm:$0x3] %v152
        %157 = vst [vmem:[%s151 + $0x2] sm:$0x3] %v153
        %158 = vst [vmem:[%s151 + $0x4] sm:$0x3] %v154
        %159 = vst [vmem:[%s151 + $0x6] sm:$0x3] %v155
        %s160 = smul.u32 %s23, 2
        %v161 = vlaneseq
        %v162 = vshrl.u32 %v161, 7
        %v163 = vstv %s160
        %v164 = vadd.s32 %v162, %v163
        %v165 = vlaneseq
        %v166 = vand.u32 %v165, 127
        %v167 = vcvt.s32.f32 %v164
        %v168 = vcvt.s32.f32 %v166
        %v169 = vrcp.pop 16.0
        %v170 = vmul.f32 %v168, %v169
        %v171 = vfloor.f32 %v170
        %v172 = vmul.f32 %v167, 8.0
        %v173 = vadd.f32 %v172, %v171
        %v174 = vmul.f32 %v171, 16.0
        %v175 = vsub.f32 %v168, %v174
        %v176 = vmul.f32 %v173, 0.13333334
        %v177 = vsub.f32 %v176, 1.0
        %v178 = vmul.f32 %v175, 0.13333334
        %v179 = vsub.f32 %v178, 1.0
        %v180 = vsub.f32 %v177, 0.5
        %v181 = vmul.f32 %v180, %v180
        %v182 = vsub.f32 %v179, 0.5
        %v183 = vmul.f32 %v182, %v182
        %v184 = vadd.f32 %v181, %v183
        %v185 = vrsqrt.pop %v184
        %v186 = vmul.f32 %v184, %v185
        %vm187 = vcmp.eq.f32.partialorder %v184, inf
        %v188 = vsel %vm187, %v184, %v186
        %vm189 = vcmp.eq.f32.partialorder %v184, 0.0
        %v190 = vand.u32 %v184, 2147483648
        %v191 = vsel %vm189, %v190, %v188
        %s192 = scalar_lea.vmem %s151, 8 [#allocation5]
        %193 = vst [vmem:[%s192] sm:$0x3] %v177
        %s194 = scalar_lea.vmem %s151, 10 [#allocation5]
        %195 = vst [vmem:[%s194] sm:$0x3] %v179
        %s196 = scalar_lea.vmem %s151, 12 [#allocation5]
        %197 = vst [vmem:[%s196] sm:$0x3] %v191
        %s198 = sand.u32 %s68, 1
        %s199 = scalar_lea.sflag [#allocation4], %s198
        %s200 = sand.u32 %s68, 1
        %s201 = smul.addr %s200, 14
        %s202 = scalar_lea.vmem [#allocation5], %s201
        // Predicated region
        $region29: #{tpu_custom_call.1} parent=23 // pred_check
          %p203 = pneg %p78
        $region30: #{tpu_custom_call.1} parent=23 // pred_check_branch
          %205 = sbr.rel (%p203) target = $region32
        $region31: #{tpu_custom_call.1} parent=23 // pred_region
          %s207 = ssub.s32 224, 224
          %208 = vsyncadd %s199, %s207
          %s209 = smul.addr %s22, 7
          %s210 = sadd.s32 %s23, %s209
          %s211 = smul.addr %s210, 32
          %s212 = scalar_lea.hbm %s1, %s211
          %s213 = sshll.u32 %s202, 4
          %s214 = int_to_ptr.vmem [resolvable:$true] %s213
          %219 = dma.vmem_to_hbm [thread:$0]  %s214, 224, %s212, %s199, 32, 32, 2
        $region32: #{tpu_custom_call.1} parent=23 // pred_fallthru
          _
      $region24: #{tpu_custom_call.1} parent=5 // pred_fallthru
        _
      %p220 = scmp.le.s32.totalorder 2, %s13
      // Predicated region
      $region33: #{tpu_custom_call.1} parent=5 // pred_check
        %p221 = pneg %p220
      $region34: #{tpu_custom_call.1} parent=5 // pred_check_branch
        %223 = sbr.rel (%p221) target = $region36
      $region35: #{tpu_custom_call.1} parent=5 // pred_region
        %s224 = ssub.s32 %s13, 2
        // Predicated region
        $region37: #{tpu_custom_call.1} parent=35 // pred_check
          %p225 = pneg %p84
        $region38: #{tpu_custom_call.1} parent=35 // pred_check_branch
          %227 = sbr.rel (%p225) target = $region40
        $region39: #{tpu_custom_call.1} parent=35 // pred_region
          %s228 = sand.u32 %s69, 1
          %s229 = scalar_lea.sflag [#allocation4], %s228
          %s230 = sand.u32 %s69, 1
          %s231 = smul.addr %s230, 14
          %s232 = scalar_lea.vmem [#allocation5], %s231
          %233 = dma.done %s229, 224
        $region40: #{tpu_custom_call.1} parent=35 // pred_fallthru
          _
      $region36: #{tpu_custom_call.1} parent=5 // pred_fallthru
        _
    $region6: #{tpu_custom_call.1} parent=1 // loop_footer
      %s17 = sadd.s32 1, %s13
    $region7: #{tpu_custom_call.1} parent=1 // loop_footer_branch
      %12 = sbr.rel target = $region3
    $region8: #{tpu_custom_call.1} parent=1 // loop_exit
      _
    %234 = vsyncpa [#allocation3], 1
    %s235 = scalar_lea.sflag [#allocation3], 1
    %236 = vsyncpa %s235, 1
    %237 = vsyncpa [#allocation4], 1
    %s238 = scalar_lea.sflag [#allocation4], 1
    %239 = vsyncpa %s238, 1

</llo_original>
